<compile_context>
chip_gen: v7x
topology: tpu7x:2x2x1
jax: 0.10.0
libtpu: 0.0.40
codegen_flags: <defaults>
</compile_context>

<pallas_src>
import functools
import numpy as np
import jax
import jax.numpy as jnp
from jax.experimental import pallas as pl
from jax.experimental.pallas import tpu as pltpu


def slate_encoder_kernel(state_ref, action_ref, noise_ref,
                         w1_ref, b1_ref, w2_ref, b2_ref,
                         latent_t_ref, logp_ref, *, inv_tau):
    L, tb = latent_t_ref.shape

    # Fused concat (torch.cat((state, action), dim=1)) + fc1 as one bf16 MXU pass.
    x = jnp.concatenate(
        [state_ref[...].astype(jnp.bfloat16), action_ref[...].astype(jnp.bfloat16)],
        axis=1)                                                       # [tb, d_in]
    h = jnp.dot(x, w1_ref[...], preferred_element_type=jnp.float32) + b1_ref[...]
    h = jnp.maximum(h, 0.0)                                           # ReLU, f32

    # fc2 -> logits [tb, L]; transpose to [L, tb] (XLU slot is idle here) so the L=8
    # softmax/argmax reductions run over sublanes and the outputs store lane-dense.
    logits = (jnp.dot(h.astype(jnp.bfloat16), w2_ref[...],
                      preferred_element_type=jnp.float32) + b2_ref[...])
    logits_t = logits.T                                               # [L, tb]

    g = noise_ref[...]                                                # [2L, tb] f32
    y1 = (logits_t + g[:L, :]) * inv_tau      # hard gumbel-softmax draw
    y2 = (logits_t + g[L:, :]) * inv_tau      # second, independent soft draw

    # Hard one-hot at the FIRST argmax of y1 (tie-safe; ties are measure-zero anyway).
    iota = jax.lax.broadcasted_iota(jnp.int32, (L, tb), 0)
    is_max = y1 >= jnp.max(y1, axis=0, keepdims=True)
    first = jnp.min(jnp.where(is_max, iota, L), axis=0, keepdims=True)
    latent = (iota == first).astype(jnp.float32)                      # exact 0/1

    # log prob of the selected latent under softmax(y2), in log-space.
    m2 = jnp.max(y2, axis=0, keepdims=True)
    lse = jnp.log(jnp.sum(jnp.exp(y2 - m2), axis=0, keepdims=True))
    sel = jnp.sum(y2 * latent, axis=0, keepdims=True)

    latent_t_ref[...] = latent.astype(latent_t_ref.dtype)             # [L, tb]  bf16 (exact)
    logp_ref[...] = sel - m2 - lse                                     # [1, tb]  f32


def _round_up(x, m):
    return ((x + m - 1) // m) * m


def _pick_batch_tile(batch, requested=None, max_tile=1024):
    """>=2 tiles when B allows (v7x has 2 TCs), <=1024 rows/tile, full block for small B."""
    if requested is None:
        tb = min(max_tile, _round_up(pl.cdiv(batch, 2), 128))
    else:
        tb = int(requested)
    if tb >= batch:
        return batch                      # single full-array block (no (8,128) issue)
    tb = max(128, (tb // 128) * 128)      # lane-dense output tiles need multiples of 128
    return batch if tb >= batch else tb


def discrete_slate_encoder_forward(state, action_onehot, params, key,
                                   *, tau=1.0, batch_tile=None):
    """Returns (latent [B, L] f32, log_prob [B] f32) matching the PyTorch forward."""
    w1, b1, w2, b2 = params               # w1: [d_in, H], b1: [H], w2: [H, L], b2: [L]
    B, d_ctx = state.shape
    d_in, H = w1.shape
    L = w2.shape[1]

    # Flattened slate one-hot (same as torch .reshape). The concat with state is fused
    # into the kernel, so no [B, d_in] concat buffer is materialized in HBM.
    action = action_onehot.reshape(B, -1)
    d_act = action.shape[1]
    assert d_ctx + d_act == d_in

    tb = _pick_batch_tile(B, batch_tile)
    n_tiles = pl.cdiv(B, tb)

    # VMEM-resident weight slabs: bf16 matmul operands (native MXU path), f32 biases.
    w1_b = w1.astype(jnp.bfloat16)
    w2_b = w2.astype(jnp.bfloat16)
    b1_r = b1.reshape(1, H).astype(jnp.float32)
    b2_r = b2.reshape(1, L).astype(jnp.float32)

    # One host-side draw covering both gumbel tensors (tile-size independent).
    noise = jax.random.gumbel(key, (2 * L, B), dtype=jnp.float32)

    kernel = functools.partial(slate_encoder_kernel, inv_tau=float(1.0 / tau))

    latent_t, logp = pl.pallas_call(
        kernel,
        grid=(n_tiles,),
        in_specs=[
            pl.BlockSpec((tb, d_ctx), lambda i: (i, 0)),     # state   (natural layout)
            pl.BlockSpec((tb, d_act), lambda i: (i, 0)),     # action  (natural layout)
            pl.BlockSpec((2 * L, tb), lambda i: (0, i)),     # gumbel noise
            pl.BlockSpec((d_in, H), lambda i: (0, 0)),       # W1  (VMEM-resident)
            pl.BlockSpec((1, H), lambda i: (0, 0)),          # b1  (VMEM-resident)
            pl.BlockSpec((H, L), lambda i: (0, 0)),          # W2  (VMEM-resident)
            pl.BlockSpec((1, L), lambda i: (0, 0)),          # b2  (VMEM-resident)
        ],
        out_specs=(
            pl.BlockSpec((L, tb), lambda i: (0, i)),         # latent^T (bf16, lane-dense)
            pl.BlockSpec((1, tb), lambda i: (0, i)),         # log_prob (lane-dense)
        ),
        out_shape=(jax.ShapeDtypeStruct((L, B), jnp.bfloat16),
                   jax.ShapeDtypeStruct((1, B), jnp.float32)),
        compiler_params=pltpu.CompilerParams(dimension_semantics=("parallel",)),
    )(state, action, noise, w1_b, b1_r, w2_b, b2_r)

    latent = latent_t.T.astype(jnp.float32)   # back to PyTorch [B, L]; values exact 0/1
    log_prob = logp[0]
    return latent, log_prob


def init_params(key, d_in, hidden_dim, n_latent):
    """Deterministic init mimicking nn.Linear default (uniform +/- 1/sqrt(fan_in))."""
    k1, k2, k3, k4 = jax.random.split(key, 4)
    lim1 = 1.0 / np.sqrt(d_in)
    lim2 = 1.0 / np.sqrt(hidden_dim)
    w1 = jax.random.uniform(k1, (d_in, hidden_dim), jnp.float32, -lim1, lim1)
    b1 = jax.random.uniform(k2, (hidden_dim,), jnp.float32, -lim1, lim1)
    w2 = jax.random.uniform(k3, (hidden_dim, n_latent), jnp.float32, -lim2, lim2)
    b2 = jax.random.uniform(k4, (n_latent,), jnp.float32, -lim2, lim2)
    return w1, b1, w2, b2


if __name__ == "__main__":
    # Module config (small, consistent with __init__):
    dim_context = 16
    n_unique_actions_arr = np.array([4, 3, 4])   # slate_size = 3, max unique actions = 4
    slate_size = n_unique_actions_arr.shape[0]
    n_unique_actions = int(n_unique_actions_arr.max())
    n_latent_abstraction = 8
    hidden_dim = 32
    batch = 8
    d_in = dim_context + n_unique_actions * slate_size  # 16 + 4*3 = 28

    root = jax.random.PRNGKey(0)
    k_param, k_state, k_act, k_gumbel = jax.random.split(root, 4)

    params = init_params(k_param, d_in, hidden_dim, n_latent_abstraction)

    state = jax.random.normal(k_state, (batch, dim_context), dtype=jnp.float32)

    # Build a valid one-hot action tensor [B, slate_size, n_unique_actions]
    act_keys = jax.random.split(k_act, slate_size)
    cols = []
    for s in range(slate_size):
        idx = jax.random.randint(act_keys[s], (batch,), 0, int(n_unique_actions_arr[s]))
        cols.append(jax.nn.one_hot(idx, n_unique_actions, dtype=jnp.float32))
    action_onehot = jnp.stack(cols, axis=1)  # [B, slate_size, n_unique_actions]

    latent, log_prob = discrete_slate_encoder_forward(
        state, action_onehot, params, k_gumbel)
    latent = jax.block_until_ready(latent)
    log_prob = jax.block_until_ready(log_prob)

    assert latent.shape == (batch, n_latent_abstraction)
    assert log_prob.shape == (batch,)
    # each latent row is exactly one-hot (tie-safe argmax)
    assert bool(jnp.allclose(latent.sum(axis=1), 1.0))
    assert bool(jnp.all((latent == 0.0) | (latent == 1.0)))
    # log_prob is a finite log-probability (<= 0)
    assert bool(jnp.all(jnp.isfinite(log_prob)))
    assert bool(jnp.all(log_prob <= 1e-6))

    print("KERNEL_OK")
</pallas_src>

<mosaic_0001>
module attributes {stable_mosaic.version = 11 : i64} {
  func.func @slate_encoder_kernel(%arg0: i32, %arg1: memref<8x16xf32, #tpu.memory_space<vmem>>, %arg2: memref<8x12xf32, #tpu.memory_space<vmem>>, %arg3: memref<16x8xf32, #tpu.memory_space<vmem>>, %arg4: memref<28x32xbf16, #tpu.memory_space<vmem>>, %arg5: memref<1x32xf32, #tpu.memory_space<vmem>>, %arg6: memref<32x8xbf16, #tpu.memory_space<vmem>>, %arg7: memref<1x8xf32, #tpu.memory_space<vmem>>, %arg8: memref<8x8xbf16, #tpu.memory_space<vmem>>, %arg9: memref<1x8xf32, #tpu.memory_space<vmem>>) attributes {dimension_semantics = [#tpu.dimension_semantics<parallel>], iteration_bounds = array<i64: 1>, scalar_prefetch = 0 : i64, scratch_operands = 0 : i64, tpu.core_type = #tpu.core_type<tc>, window_params = [{transform_indices = @transform_0, window_bounds = array<i64: 8, 16>}, {transform_indices = @transform_1, window_bounds = array<i64: 8, 12>}, {transform_indices = @transform_2, window_bounds = array<i64: 16, 8>}, {pipeline_mode = #tpu.pipeline_mode<synchronous>, transform_indices = @transform_3, window_bounds = array<i64: 28, 32>}, {pipeline_mode = #tpu.pipeline_mode<synchronous>, transform_indices = @transform_4, window_bounds = array<i64: 1, 32>}, {pipeline_mode = #tpu.pipeline_mode<synchronous>, transform_indices = @transform_5, window_bounds = array<i64: 32, 8>}, {pipeline_mode = #tpu.pipeline_mode<synchronous>, transform_indices = @transform_6, window_bounds = array<i64: 1, 8>}, {transform_indices = @transform_7, window_bounds = array<i64: 8, 8>}, {transform_indices = @transform_8, window_bounds = array<i64: 1, 8>}]} {
    %c0 = arith.constant 0 : index
    %c0_0 = arith.constant 0 : index
    %0 = vector.load %arg1[%c0, %c0_0] : memref<8x16xf32, #tpu.memory_space<vmem>>, vector<8x16xf32>
    %1 = arith.truncf %0 : vector<8x16xf32> to vector<8x16xbf16>
    %c0_1 = arith.constant 0 : index
    %c0_2 = arith.constant 0 : index
    %2 = vector.load %arg2[%c0_1, %c0_2] : memref<8x12xf32, #tpu.memory_space<vmem>>, vector<8x12xf32>
    %3 = arith.truncf %2 : vector<8x12xf32> to vector<8x12xbf16>
    %4 = tpu.concatenate %1, %3 in 1 : vector<8x16xbf16>, vector<8x12xbf16> -> vector<8x28xbf16>
    %c0_3 = arith.constant 0 : index
    %c0_4 = arith.constant 0 : index
    %5 = vector.load %arg4[%c0_3, %c0_4] : memref<28x32xbf16, #tpu.memory_space<vmem>>, vector<28x32xbf16>
    %cst = arith.constant dense<0.000000e+00> : vector<8x32xf32>
    %6 = tpu.matmul %4, %5, %cst {dimension_numbers = #tpu.dot_dimension_numbers<[1], [0], [0], [1], [0, 0, 1, 1], [], []>} : vector<8x28xbf16>, vector<28x32xbf16>, vector<8x32xf32> -> vector<8x32xf32>
    %c0_5 = arith.constant 0 : index
    %c0_6 = arith.constant 0 : index
    %7 = vector.load %arg5[%c0_5, %c0_6] : memref<1x32xf32, #tpu.memory_space<vmem>>, vector<1x32xf32>
    %8 = vector.broadcast %7 : vector<1x32xf32> to vector<8x32xf32>
    %9 = arith.addf %6, %8 : vector<8x32xf32>
    %cst_7 = arith.constant 0.000000e+00 : f32
    %10 = vector.broadcast %cst_7 : f32 to vector<8x32xf32>
    %11 = arith.maximumf %9, %10 : vector<8x32xf32>
    %12 = arith.truncf %11 : vector<8x32xf32> to vector<8x32xbf16>
    %c0_8 = arith.constant 0 : index
    %c0_9 = arith.constant 0 : index
    %13 = vector.load %arg6[%c0_8, %c0_9] : memref<32x8xbf16, #tpu.memory_space<vmem>>, vector<32x8xbf16>
    %cst_10 = arith.constant dense<0.000000e+00> : vector<8x8xf32>
    %14 = tpu.matmul %12, %13, %cst_10 {dimension_numbers = #tpu.dot_dimension_numbers<[1], [0], [0], [1], [0, 0, 1, 1], [], []>} : vector<8x32xbf16>, vector<32x8xbf16>, vector<8x8xf32> -> vector<8x8xf32>
    %c0_11 = arith.constant 0 : index
    %c0_12 = arith.constant 0 : index
    %15 = vector.load %arg7[%c0_11, %c0_12] : memref<1x8xf32, #tpu.memory_space<vmem>>, vector<1x8xf32>
    %16 = vector.broadcast %15 : vector<1x8xf32> to vector<8x8xf32>
    %17 = arith.addf %14, %16 : vector<8x8xf32>
    %18 = tpu.transpose %17, [1, 0] : vector<8x8xf32> -> vector<8x8xf32>
    %c0_13 = arith.constant 0 : index
    %c0_14 = arith.constant 0 : index
    %19 = vector.load %arg3[%c0_13, %c0_14] : memref<16x8xf32, #tpu.memory_space<vmem>>, vector<16x8xf32>
    %20 = vector.extract_strided_slice %19 {offsets = [0, 0], sizes = [8, 8], strides = [1, 1]} : vector<16x8xf32> to vector<8x8xf32>
    %21 = arith.addf %18, %20 : vector<8x8xf32>
    %cst_15 = arith.constant 1.000000e+00 : f32
    %22 = vector.broadcast %cst_15 : f32 to vector<8x8xf32>
    %23 = arith.mulf %21, %22 : vector<8x8xf32>
    %24 = vector.extract_strided_slice %19 {offsets = [8, 0], sizes = [8, 8], strides = [1, 1]} : vector<16x8xf32> to vector<8x8xf32>
    %25 = arith.addf %18, %24 : vector<8x8xf32>
    %cst_16 = arith.constant 1.000000e+00 : f32
    %26 = vector.broadcast %cst_16 : f32 to vector<8x8xf32>
    %27 = arith.mulf %25, %26 : vector<8x8xf32>
    %28 = tpu.iota {dimensions = array<i32: 0>} : vector<8x8xi32>
    %cst_17 = arith.constant dense<0xFF800000> : vector<8xf32>
    %29 = vector.multi_reduction <maximumf>, %23, %cst_17 [0] : vector<8x8xf32> to vector<8xf32>
    %30 = vector.shape_cast %29 : vector<8xf32> to vector<1x8xf32>
    %31 = vector.broadcast %30 : vector<1x8xf32> to vector<8x8xf32>
    %32 = arith.cmpf oge, %23, %31 : vector<8x8xf32>
    %c8_i32 = arith.constant 8 : i32
    %33 = vector.broadcast %c8_i32 : i32 to vector<8x8xi32>
    %34 = arith.select %32, %28, %33 : vector<8x8xi1>, vector<8x8xi32>
    %cst_18 = arith.constant dense<2147483647> : vector<8xi32>
    %35 = vector.multi_reduction <minsi>, %34, %cst_18 [0] : vector<8x8xi32> to vector<8xi32>
    %36 = vector.shape_cast %35 : vector<8xi32> to vector<1x8xi32>
    %37 = vector.broadcast %36 : vector<1x8xi32> to vector<8x8xi32>
    %38 = arith.cmpi eq, %28, %37 : vector<8x8xi32>
    %39 = arith.extui %38 : vector<8x8xi1> to vector<8x8xi32>
    %40 = arith.sitofp %39 : vector<8x8xi32> to vector<8x8xf32>
    %cst_19 = arith.constant dense<0xFF800000> : vector<8xf32>
    %41 = vector.multi_reduction <maximumf>, %27, %cst_19 [0] : vector<8x8xf32> to vector<8xf32>
    %42 = vector.shape_cast %41 : vector<8xf32> to vector<1x8xf32>
    %43 = vector.broadcast %42 : vector<1x8xf32> to vector<8x8xf32>
    %44 = arith.subf %27, %43 : vector<8x8xf32>
    %45 = math.exp %44 : vector<8x8xf32>
    %cst_20 = arith.constant dense<0.000000e+00> : vector<8xf32>
    %46 = vector.multi_reduction <add>, %45, %cst_20 [0] : vector<8x8xf32> to vector<8xf32>
    %47 = vector.shape_cast %46 : vector<8xf32> to vector<1x8xf32>
    %48 = math.log %47 : vector<1x8xf32>
    %49 = arith.mulf %27, %40 : vector<8x8xf32>
    %cst_21 = arith.constant dense<0.000000e+00> : vector<8xf32>
    %50 = vector.multi_reduction <add>, %49, %cst_21 [0] : vector<8x8xf32> to vector<8xf32>
    %51 = vector.shape_cast %50 : vector<8xf32> to vector<1x8xf32>
    %52 = arith.truncf %40 : vector<8x8xf32> to vector<8x8xbf16>
    %c0_22 = arith.constant 0 : index
    %c0_23 = arith.constant 0 : index
    %53 = vector.load %arg8[%c0_22, %c0_23] : memref<8x8xbf16, #tpu.memory_space<vmem>>, vector<8x8xbf16>
    tpu.vector_store %arg8[%c0_22, %c0_23], %52 {strides = array<i32>} : memref<8x8xbf16, #tpu.memory_space<vmem>>, vector<8x8xbf16>,
    %54 = arith.subf %51, %42 : vector<1x8xf32>
    %55 = arith.subf %54, %48 : vector<1x8xf32>
    %c0_24 = arith.constant 0 : index
    %c0_25 = arith.constant 0 : index
    %56 = vector.load %arg9[%c0_24, %c0_25] : memref<1x8xf32, #tpu.memory_space<vmem>>, vector<1x8xf32>
    tpu.vector_store %arg9[%c0_24, %c0_25], %55 {strides = array<i32>} : memref<1x8xf32, #tpu.memory_space<vmem>>, vector<1x8xf32>,
    return
  }
  func.func @transform_0(%arg0: i32) -> (i32, i32) {
    %c0_i32 = arith.constant 0 : i32
    %c0_i32_0 = arith.constant 0 : i32
    return %arg0, %c0_i32 : i32, i32
  }
  func.func @transform_1(%arg0: i32) -> (i32, i32) {
    %c0_i32 = arith.constant 0 : i32
    %c0_i32_0 = arith.constant 0 : i32
    return %arg0, %c0_i32 : i32, i32
  }
  func.func @transform_2(%arg0: i32) -> (i32, i32) {
    %c0_i32 = arith.constant 0 : i32
    %c0_i32_0 = arith.constant 0 : i32
    return %c0_i32, %arg0 : i32, i32
  }
  func.func @transform_3(%arg0: i32) -> (i32, i32) {
    %c0_i32 = arith.constant 0 : i32
    %c0_i32_0 = arith.constant 0 : i32
    %c0_i32_1 = arith.constant 0 : i32
    return %c0_i32, %c0_i32_0 : i32, i32
  }
  func.func @transform_4(%arg0: i32) -> (i32, i32) {
    %c0_i32 = arith.constant 0 : i32
    %c0_i32_0 = arith.constant 0 : i32
    %c0_i32_1 = arith.constant 0 : i32
    return %c0_i32, %c0_i32_0 : i32, i32
  }
  func.func @transform_5(%arg0: i32) -> (i32, i32) {
    %c0_i32 = arith.constant 0 : i32
    %c0_i32_0 = arith.constant 0 : i32
    %c0_i32_1 = arith.constant 0 : i32
    return %c0_i32, %c0_i32_0 : i32, i32
  }
  func.func @transform_6(%arg0: i32) -> (i32, i32) {
    %c0_i32 = arith.constant 0 : i32
    %c0_i32_0 = arith.constant 0 : i32
    %c0_i32_1 = arith.constant 0 : i32
    return %c0_i32, %c0_i32_0 : i32, i32
  }
  func.func @transform_7(%arg0: i32) -> (i32, i32) {
    %c0_i32 = arith.constant 0 : i32
    %c0_i32_0 = arith.constant 0 : i32
    return %c0_i32, %arg0 : i32, i32
  }
  func.func @transform_8(%arg0: i32) -> (i32, i32) {
    %c0_i32 = arith.constant 0 : i32
    %c0_i32_0 = arith.constant 0 : i32
    return %c0_i32, %arg0 : i32, i32
  }
}

</mosaic_0001>

<llo_original>
// kernel: tpu_custom_call.1
$region0: #{tpu_custom_call.1}
  #allocation0 [shape = 'u32[]', space=smem, size = 0x4, offset = 0x4, fixed_abs, tag = 'smem constant byte address 0x4 - core index']
  #allocation1 [shape = 'u32[144,128]{1,0:T(1,128)}', space=vmem, size = 0x12000, scoped, tag = 'internal scratch']
  %s0 = inlined_call_operand.vmem [shape: f32[8,16], index: 0, kind: input, shape index: {}]
  %s1 = inlined_call_operand.vmem [shape: f32[8,12], index: 1, kind: input, shape index: {}]
  %s2 = inlined_call_operand.vmem [shape: f32[16,8], index: 2, kind: input, shape index: {}]
  %s3 = inlined_call_operand.vmem [shape: bf16[28,32], index: 3, kind: input, shape index: {}]
  %s4 = inlined_call_operand.vmem [shape: f32[1,32], index: 4, kind: input, shape index: {}]
  %s5 = inlined_call_operand.vmem [shape: bf16[32,8], index: 5, kind: input, shape index: {}]
  %s6 = inlined_call_operand.vmem [shape: f32[1,8], index: 6, kind: input, shape index: {}]
  %s7 = inlined_call_operand.hbm [shape: bf16[8,8], index: 7, kind: output, shape index: {0}]
  %s8 = inlined_call_operand.hbm [shape: f32[1,8], index: 8, kind: output, shape index: {1}]
  %9 = xla_tuple %s7, %s8
  %s10 = sld [smem:[#allocation0]]
  $region46: #{tpu_custom_call.1} parent=0
    _
  %s12 = ssub.s32 1, %s10
  %s13 = scalar_select 0, %s12, %s10
  $region1: #{tpu_custom_call.1} parent=0
    #allocation2 [shape = 'u8[2048]{0}', space=vmem, size = 0x800, scoped, tag = 'output window, operand 0, single buffered']
    #allocation3 [shape = 's32[1]{0}', space=sflag, size = 0x4, scoped, tag = 'scoped memory for tpu_custom_call.1']
    #allocation4 [shape = 'u8[512]{0}', space=vmem, size = 0x400, scoped, tag = 'output window, operand 1, single buffered']
    #allocation5 [shape = 's32[1]{0}', space=sflag, size = 0x4, scoped, tag = 'scoped memory for tpu_custom_call.1']
    %14 = vsyncpa [#allocation3], 0
    %15 = vsyncpa [#allocation5], 0
    // Predicated region
    $region2: #{tpu_custom_call.1} parent=1 // pred_check
      _
    $region3: #{tpu_custom_call.1} parent=1 // pred_check_branch
      %17 = sbr.rel (0) target = $region5
    $region4: #{tpu_custom_call.1} parent=1 // pred_region
      _
    $region5: #{tpu_custom_call.1} parent=1 // pred_fallthru
      _
    // Predicated region
    $region6: #{tpu_custom_call.1} parent=1 // pred_check
      _
    $region7: #{tpu_custom_call.1} parent=1 // pred_check_branch
      %19 = sbr.rel (0) target = $region9
    $region8: #{tpu_custom_call.1} parent=1 // pred_region
      _
    $region9: #{tpu_custom_call.1} parent=1 // pred_fallthru
      _
    // Predicated region
    $region10: #{tpu_custom_call.1} parent=1 // pred_check
      _
    $region11: #{tpu_custom_call.1} parent=1 // pred_check_branch
      %21 = sbr.rel (0) target = $region13
    $region12: #{tpu_custom_call.1} parent=1 // pred_region
      _
    $region13: #{tpu_custom_call.1} parent=1 // pred_fallthru
      _
    // Predicated region
    $region14: #{tpu_custom_call.1} parent=1 // pred_check
      _
    $region15: #{tpu_custom_call.1} parent=1 // pred_check_branch
      %23 = sbr.rel (0) target = $region17
    $region16: #{tpu_custom_call.1} parent=1 // pred_region
      _
    $region17: #{tpu_custom_call.1} parent=1 // pred_fallthru
      _
    // Predicated region
    $region18: #{tpu_custom_call.1} parent=1 // pred_check
      _
    $region19: #{tpu_custom_call.1} parent=1 // pred_check_branch
      %25 = sbr.rel (0) target = $region21
    $region20: #{tpu_custom_call.1} parent=1 // pred_region
      _
    $region21: #{tpu_custom_call.1} parent=1 // pred_fallthru
      _
    // Predicated region
    $region22: #{tpu_custom_call.1} parent=1 // pred_check
      _
    $region23: #{tpu_custom_call.1} parent=1 // pred_check_branch
      %27 = sbr.rel (0) target = $region25
    $region24: #{tpu_custom_call.1} parent=1 // pred_region
      _
    $region25: #{tpu_custom_call.1} parent=1 // pred_fallthru
      _
    // Predicated region
    $region26: #{tpu_custom_call.1} parent=1 // pred_check
      _
    $region27: #{tpu_custom_call.1} parent=1 // pred_check_branch
      %29 = sbr.rel (0) target = $region29
    $region28: #{tpu_custom_call.1} parent=1 // pred_region
      _
    $region29: #{tpu_custom_call.1} parent=1 // pred_fallthru
      _
    %v31 = vld [vmem:[%s0] sm:$0xff]
    %v32 = vpack.c.bf16 %v31, %v31
    %v33 = vld [vmem:[%s1] sm:$0xff]
    %v34 = vpack.c.bf16 %v33, %v33
    %36 = vrot.lane.b32.xlu0 %v34, 16
    %v37 = vpop.permute.xlu0 %36
    %vm38 = vcmask 130048
    %v41 = vsel %vm38, %v32, %v37
    %v42 = vld [vmem:[%s3] sm:$0xf]
    %v43 = vld [vmem:[%s3 + $0x4] sm:$0xf]
    %v44 = vld [vmem:[%s3 + $0x8] sm:$0xf]
    %v45 = vld [vmem:[%s3 + $0xc] sm:$0x3]
    %v46 = vld [vmem:[%s4] sm:$0x1]
    %v48 = vlaneseq
    %v49 = vshrl.u32 %v48, 7
    %v50 = vsub.s32 0, %v49
    %v51 = vrot.slane %v46, %v50
    %v57 = vunpack.c.l.b16 %v42
    %v58 = vunpack.c.l.b16 %v43
    %v59 = vunpack.c.l.b16 %v44
    %v60 = vunpack.c.l.b16 %v45
    %v61 = vpack.c.b16 %v58, %v57
    %v62 = vpack.c.b16 %v60, %v59
    %vm64 = vcmask 228352
    %v65 = vsel %vm64, %v41, 0
    %vm67 = vcmask 1045504
    %v69 = vsel %vm67, %v62, 0
    %71 = vmatprep.subr.bf16.mxu0 0
    %72 = vmatpush1.bf16.msra.mxu0 %v61
    %73 = vmatprep.subr.bf16.mxu0 0
    %74 = vmatpush1.bf16.msra.mxu0 %v69
    %75 = vmatprep.subr.bf16.mxu0 0
    %76 = vmatpush1.bf16.msra.mxu0 0
    %77 = vmatprep.subr.bf16.mxu0 0
    %78 = vmatpush1.bf16.msra.mxu0 0
    %79 = vmatprep.subr.bf16.mxu0 0
    %80 = vmatpush1.bf16.msra.mxu0 0
    %81 = vmatprep.subr.bf16.mxu0 0
    %82 = vmatpush1.bf16.msra.mxu0 0
    %83 = vmatprep.subr.bf16.mxu0 0
    %84 = vmatpush1.bf16.msra.mxu0 0
    %85 = vmatprep.subr.bf16.mxu0 0
    %86 = vmatpush1.bf16.msra.mxu0 0
    %87 = vmatprep.subr.bf16.mxu0 0
    %88 = vmatpush1.bf16.msra.mxu0 0
    %89 = vmatprep.subr.bf16.mxu0 0
    %90 = vmatpush1.bf16.msra.mxu0 0
    %91 = vmatprep.subr.bf16.mxu0 0
    %92 = vmatpush1.bf16.msra.mxu0 0
    %93 = vmatprep.subr.bf16.mxu0 0
    %94 = vmatpush1.bf16.msra.mxu0 0
    %95 = vmatprep.subr.bf16.mxu0 0
    %96 = vmatpush1.bf16.msra.mxu0 0
    %97 = vmatprep.subr.bf16.mxu0 0
    %98 = vmatpush1.bf16.msra.mxu0 0
    %99 = vmatprep.subr.bf16.mxu0 0
    %100 = vmatpush1.bf16.msra.mxu0 0
    %101 = vmatprep.subr.bf16.mxu0 0
    %102 = vmatpush1.bf16.msra.mxu0 0
    %103 = vmatprep.mubr.bf16.mxu0 0
    %104 = vmatmul.mubr.bf16.gmra.mrb[0].mxu0 %v65
    %v105 = vpop.f32.mrb[0].mxu0
    %v106 = vadd.f32 %v51, %v105
    %v107 = vpop.f32.mrb[0].mxu0
    %v108 = vpop.f32.mrb[0].mxu0
    %v109 = vpop.f32.mrb[0].mxu0
    %110 = vdwg.mxu0
    %v111 = vmax.f32 %v106, 0.0
    %v112 = vpack.c.bf16 %v111, %v111
    %v113 = vld [vmem:[%s5] sm:$0xf]
    %v114 = vld [vmem:[%s5 + $0x4] sm:$0xf]
    %v115 = vld [vmem:[%s5 + $0x8] sm:$0xf]
    %v116 = vld [vmem:[%s5 + $0xc] sm:$0xf]
    %v117 = vld [vmem:[%s6] sm:$0x1]
    %v119 = vlaneseq
    %v120 = vshrl.u32 %v119, 7
    %v121 = vsub.s32 0, %v120
    %v122 = vrot.slane %v117, %v121
    %v128 = vunpack.c.l.b16 %v113
    %v129 = vunpack.c.l.b16 %v114
    %v130 = vunpack.c.l.b16 %v115
    %v131 = vunpack.c.l.b16 %v116
    %v132 = vpack.c.b16 %v129, %v128
    %v133 = vpack.c.b16 %v131, %v130
    %vm136 = vcmask 261120
    %v138 = vsel %vm136, %v112, 0
    %140 = vmatprep.subr.bf16.mxu0 0
    %141 = vmatpush1.bf16.msra.mxu0 %v132
    %142 = vmatprep.subr.bf16.mxu0 0
    %143 = vmatpush1.bf16.msra.mxu0 %v133
    %144 = vmatprep.subr.bf16.mxu0 0
    %145 = vmatpush1.bf16.msra.mxu0 0
    %146 = vmatprep.subr.bf16.mxu0 0
    %147 = vmatpush1.bf16.msra.mxu0 0
    %148 = vmatprep.subr.bf16.mxu0 0
    %149 = vmatpush1.bf16.msra.mxu0 0
    %150 = vmatprep.subr.bf16.mxu0 0
    %151 = vmatpush1.bf16.msra.mxu0 0
    %152 = vmatprep.subr.bf16.mxu0 0
    %153 = vmatpush1.bf16.msra.mxu0 0
    %154 = vmatprep.subr.bf16.mxu0 0
    %155 = vmatpush1.bf16.msra.mxu0 0
    %156 = vmatprep.subr.bf16.mxu0 0
    %157 = vmatpush1.bf16.msra.mxu0 0
    %158 = vmatprep.subr.bf16.mxu0 0
    %159 = vmatpush1.bf16.msra.mxu0 0
    %160 = vmatprep.subr.bf16.mxu0 0
    %161 = vmatpush1.bf16.msra.mxu0 0
    %162 = vmatprep.subr.bf16.mxu0 0
    %163 = vmatpush1.bf16.msra.mxu0 0
    %164 = vmatprep.subr.bf16.mxu0 0
    %165 = vmatpush1.bf16.msra.mxu0 0
    %166 = vmatprep.subr.bf16.mxu0 0
    %167 = vmatpush1.bf16.msra.mxu0 0
    %168 = vmatprep.subr.bf16.mxu0 0
    %169 = vmatpush1.bf16.msra.mxu0 0
    %170 = vmatprep.subr.bf16.mxu0 0
    %171 = vmatpush1.bf16.msra.mxu0 0
    %172 = vmatprep.mubr.bf16.mxu0 0
    %173 = vmatmul.mubr.bf16.gmra.mrb[0].mxu0 %v138
    %v174 = vpop.f32.mrb[0].mxu0
    %v175 = vadd.f32 %v122, %v174
    %v176 = vpop.f32.mrb[0].mxu0
    %v177 = vpop.f32.mrb[0].mxu0
    %v178 = vpop.f32.mrb[0].mxu0
    %179 = vdwg.mxu0
    %180 = vxpose.xlu0.b32.start [1/16] %v175, 128
    %181 = vxpose.xlu0.b32.cont [2/16] 0.0, 128
    %182 = vxpose.xlu0.b32.cont [3/16] 0.0, 128
    %183 = vxpose.xlu0.b32.cont [4/16] 0.0, 128
    %184 = vxpose.xlu0.b32.cont [5/16] 0.0, 128
    %185 = vxpose.xlu0.b32.cont [6/16] 0.0, 128
    %186 = vxpose.xlu0.b32.cont [7/16] 0.0, 128
    %187 = vxpose.xlu0.b32.cont [8/16] 0.0, 128
    %188 = vxpose.xlu0.b32.cont [9/16] 0.0, 128
    %189 = vxpose.xlu0.b32.cont [10/16] 0.0, 128
    %190 = vxpose.xlu0.b32.cont [11/16] 0.0, 128
    %191 = vxpose.xlu0.b32.cont [12/16] 0.0, 128
    %192 = vxpose.xlu0.b32.cont [13/16] 0.0, 128
    %193 = vxpose.xlu0.b32.cont [14/16] 0.0, 128
    %194 = vxpose.xlu0.b32.cont [15/16] 0.0, 128
    %195 = vxpose.xlu0.b32.end [16/16] 0.0, 128
    %v196 = vpop.trf.xlu0
    %v197 = vpop.trf.xlu0
    %v198 = vpop.trf.xlu0
    %v199 = vpop.trf.xlu0
    %v200 = vpop.trf.xlu0
    %v201 = vpop.trf.xlu0
    %v202 = vpop.trf.xlu0
    %v203 = vpop.trf.xlu0
    %v204 = vpop.trf.xlu0
    %v205 = vpop.trf.xlu0
    %v206 = vpop.trf.xlu0
    %v207 = vpop.trf.xlu0
    %v208 = vpop.trf.xlu0
    %v209 = vpop.trf.xlu0
    %v210 = vpop.trf.xlu0
    %v211 = vpop.trf.xlu0
    %v212 = vld [vmem:[%s2] sm:$0xff]
    %v213 = vld [vmem:[%s2 + $0x8] sm:$0xff]
    %v214 = vadd.f32 %v196, %v212
    %v215 = vadd.f32 %v196, %v213
    %v216 = vlaneseq
    %v217 = vshrl.u32 %v216, 7
    %vm218 = vcmask 64512
    %v219 = vsel %vm218, %v214, -inf
    %v220 = vrot.slane %v219, 4
    %v221 = vmax.f32 %v219, %v220
    %v222 = vrot.slane %v221, 2
    %v223 = vmax.f32 %v221, %v222
    %v224 = vrot.slane %v223, 1
    %v225 = vmax.f32 %v223, %v224
    %vm226 = vcmp.ge.f32.partialorder %v214, %v225
    %v227 = vsel %vm226, %v217, 8
    %v228 = vsel %vm218, %v227, 2147483647
    %v229 = vrot.slane %v228, 4
    %vm230 = vcmp.lt.s32.totalorder %v228, %v229
    %v231 = vsel %vm230, %v228, %v229
    %v232 = vrot.slane %v231, 2
    %vm233 = vcmp.lt.s32.totalorder %v231, %v232
    %v234 = vsel %vm233, %v231, %v232
    %v235 = vrot.slane %v234, 1
    %vm236 = vcmp.lt.s32.totalorder %v234, %v235
    %v237 = vsel %vm236, %v234, %v235
    %vm238 = vcmp.eq.s32.totalorder %v217, %v237
    %v239 = vsel %vm238, 1, 0
    %v240 = vcvt.s32.f32 %v239
    %v241 = vsel %vm218, %v215, -inf
    %v242 = vrot.slane %v241, 4
    %v243 = vmax.f32 %v241, %v242
    %v244 = vrot.slane %v243, 2
    %v245 = vmax.f32 %v243, %v244
    %v246 = vrot.slane %v245, 1
    %v247 = vmax.f32 %v245, %v246
    %v248 = vsub.f32 %v215, %v247
    %v249 = vmul.f32 %v248, 1.442695
    %v250 = vpow.pop %v249
    %v251 = vsel %vm218, %v250, 0.0
    %v252 = vrot.slane %v251, 4
    %v253 = vadd.f32 %v251, %v252
    %v254 = vrot.slane %v253, 2
    %v255 = vadd.f32 %v253, %v254
    %v256 = vrot.slane %v255, 1
    %v257 = vadd.f32 %v255, %v256
    %v258 = vlog2.pop %v257
    %v259 = vmul.f32 %v258, 0.6931472
    %v260 = vmul.f32 %v215, %v240
    %v261 = vsel %vm218, %v260, 0.0
    %v262 = vrot.slane %v261, 4
    %v263 = vadd.f32 %v261, %v262
    %v264 = vrot.slane %v263, 2
    %v265 = vadd.f32 %v263, %v264
    %v266 = vrot.slane %v265, 1
    %v267 = vadd.f32 %v265, %v266
    %v268 = vpack.c.bf16 %v240, %v240
    %vm269 = vcmask 60416
    %270 = vst.msk [vmem:[#allocation2] sm:$0xf] %vm269, %v268
    %v271 = vsub.f32 %v267, %v247
    %v272 = vsub.f32 %v271, %v259
    %vm273 = vcmask 57344
    %274 = vst.msk [vmem:[#allocation4] sm:$0x1] %vm273, %v272
    // Predicated region
    $region30: #{tpu_custom_call.1} parent=1 // pred_check
      _
    $region31: #{tpu_custom_call.1} parent=1 // pred_check_branch
      %276 = sbr.rel (0) target = $region33
    $region32: #{tpu_custom_call.1} parent=1 // pred_region
      %s278 = ssub.s32 64, 64
      %279 = vsyncadd [#allocation3], %s278
      %s281 = sshll.u32 [#allocation2], 4
      %s282 = int_to_ptr.vmem [resolvable:$true] %s281
      %284 = dma.vmem_to_hbm [thread:$0]  %s282, 64, %s7, [#allocation3]
    $region33: #{tpu_custom_call.1} parent=1 // pred_fallthru
      _
    // Predicated region
    $region34: #{tpu_custom_call.1} parent=1 // pred_check
      _
    $region35: #{tpu_custom_call.1} parent=1 // pred_check_branch
      %286 = sbr.rel (0) target = $region37
    $region36: #{tpu_custom_call.1} parent=1 // pred_region
      %s288 = ssub.s32 16, 16
      %289 = vsyncadd [#allocation5], %s288
      %s291 = sshll.u32 [#allocation4], 4
      %s292 = int_to_ptr.vmem [resolvable:$true] %s291
      %294 = dma.vmem_to_hbm [thread:$0]  %s292, 16, %s8, [#allocation5]
    $region37: #{tpu_custom_call.1} parent=1 // pred_fallthru
      _
    // Predicated region
    $region38: #{tpu_custom_call.1} parent=1 // pred_check
      _
    $region39: #{tpu_custom_call.1} parent=1 // pred_check_branch
      %296 = sbr.rel (0) target = $region41
    $region40: #{tpu_custom_call.1} parent=1 // pred_region
      %297 = dma.done [#allocation3], 64
    $region41: #{tpu_custom_call.1} parent=1 // pred_fallthru
      _
    // Predicated region
    $region42: #{tpu_custom_call.1} parent=1 // pred_check
      _
    $region43: #{tpu_custom_call.1} parent=1 // pred_check_branch
      %299 = sbr.rel (0) target = $region45
    $region44: #{tpu_custom_call.1} parent=1 // pred_region
      %300 = dma.done [#allocation5], 16
    $region45: #{tpu_custom_call.1} parent=1 // pred_fallthru
      _
    %301 = vsyncpa [#allocation3], 1
    %302 = vsyncpa [#allocation5], 1

</llo_original>
